<compile_context>
chip_gen: v7x
topology: tpu7x:2x2x1
jax: 0.10.0
libtpu: 0.0.40
codegen_flags: <defaults>
</compile_context>

<pallas_src>
import functools

import jax
import jax.numpy as jnp
from jax import lax
from jax.experimental import pallas as pl
from jax.experimental.pallas import tpu as pltpu


def _rnn_fc_kernel(x_ref, wih_ref, rows_ref, whh_ref, bfc_ref, out_ref, *, T, B):
    """Fused forward: input projection + tanh recurrence + final Linear.

    x_ref    : (T*B, I)  time-major input; row t*B + b == x[b, t, :]
    wih_ref  : (I, H)    W_ih^T
    rows_ref : (2, H)    row 0 = b_ih + b_hh (fused RNN bias), row 1 = W_fc as a row
    whh_ref  : (H, H)    W_hh^T
    bfc_ref  : (1, 1)    fc bias (SMEM scalar)
    out_ref  : (B, 1)    output
    """
    bias = rows_ref[0:1, :]          # (1, H)  fused RNN bias
    wfc = rows_ref[1:2, :]           # (1, H)  fc weight row

    # One hoisted MXU matmul for the input projection of ALL time steps; this is
    # the only place K = input_size appears, and it stays off the serial chain.
    xp = jnp.dot(x_ref[...], wih_ref[...],
                 preferred_element_type=jnp.float32) + bias      # (T*B, H)

    # W_hh^T stays live as a value across the unrolled recurrence so Mosaic can
    # hoist the MXU RHS push out of the loop.
    # TODO(synk): drive the MXU explicitly (matmul_push_rhs/acc_lhs/pop) only if a
    # bundle dump shows the RHS push being re-issued every step.
    whh = whh_ref[...]

    # h0 = 0 (PyTorch default when no hx is passed)  =>  h1 = tanh(xp[t=0]).
    h = jnp.tanh(xp[0:B, :])

    # Fully unrolled recurrence; h carried in vregs, no VMEM round trips, and the
    # EUP tanh of step t can overlap the MXU work of step t+1.
    for t in range(1, T):
        pre = xp[t * B:(t + 1) * B, :] + jnp.dot(
            h, whh, preferred_element_type=jnp.float32)
        h = jnp.tanh(pre)

    # fc(out[:, -1, :]) == sum_lanes(h * w_fc) + b_fc  -- VPU/XLU, no N=1 matmul.
    out_ref[...] = jnp.sum(h * wfc, axis=-1, keepdims=True) + bfc_ref[0, 0]


@jax.jit
def rnn_model_forward(x, w_ih, w_hh, b_ih, b_hh, w_fc, b_fc):
    """x: (B, T, I) float32, batch-first (PyTorch convention). Returns (B, 1)."""
    B, T, I = x.shape
    H = w_hh.shape[0]

    xf = x.astype(jnp.float32)
    # Layout plumbing only (no compute hoisted out of the kernel): time-major
    # flatten of x and pre-transposed / packed weights.
    x_tm = jnp.transpose(xf, (1, 0, 2)).reshape(T * B, I)          # (T*B, I)
    wih_t = jnp.transpose(w_ih).astype(jnp.float32)                # (I, H)
    rows = jnp.stack(
        [(b_ih + b_hh).astype(jnp.float32),                        # fused RNN bias
         w_fc.reshape(H).astype(jnp.float32)],                     # fc weight row
        axis=0)                                                    # (2, H)
    whh_t = jnp.transpose(w_hh).astype(jnp.float32)                # (H, H)
    bfc = b_fc.reshape(1, 1).astype(jnp.float32)                   # (1, 1)

    vmem = pl.BlockSpec(memory_space=pltpu.MemorySpace.VMEM)
    smem = pl.BlockSpec(memory_space=pltpu.MemorySpace.SMEM)

    return pl.pallas_call(
        functools.partial(_rnn_fc_kernel, T=T, B=B),
        out_shape=jax.ShapeDtypeStruct((B, 1), jnp.float32),
        # Tiny footprint: everything fully VMEM/SMEM resident, single invocation,
        # no grid, no pipelining (deliberate on v7x as well).
        in_specs=[vmem, vmem, vmem, vmem, smem],
        out_specs=vmem,
    )(x_tm, wih_t, rows, whh_t, bfc)


def _reference_forward(x, w_ih, w_hh, b_ih, b_hh, w_fc, b_fc):
    """Pure-JAX reference mirroring the PyTorch module."""
    B, T, I = x.shape
    H = w_hh.shape[0]
    h = jnp.zeros((B, H), jnp.float32)

    def step(h, x_t):
        h = jnp.tanh(x_t @ w_ih.T + b_ih + h @ w_hh.T + b_hh)
        return h, None

    h_T, _ = lax.scan(step, h, jnp.transpose(x, (1, 0, 2)))
    return h_T @ w_fc.T + b_fc


if __name__ == "__main__":
    # Shapes implied by the module: input_size = len(features) = 3, hidden = 64.
    B, T, I, H = 2, 8, 3, 64

    key = jax.random.PRNGKey(0)
    keys = jax.random.split(key, 7)
    bound = 1.0 / jnp.sqrt(H)

    x = jax.random.normal(keys[0], (B, T, I), jnp.float32)
    w_ih = jax.random.uniform(keys[1], (H, I), jnp.float32, -bound, bound)
    w_hh = jax.random.uniform(keys[2], (H, H), jnp.float32, -bound, bound)
    b_ih = jax.random.uniform(keys[3], (H,), jnp.float32, -bound, bound)
    b_hh = jax.random.uniform(keys[4], (H,), jnp.float32, -bound, bound)
    w_fc = jax.random.uniform(keys[5], (1, H), jnp.float32, -bound, bound)
    b_fc = jax.random.uniform(keys[6], (1,), jnp.float32, -bound, bound)

    out = rnn_model_forward(x, w_ih, w_hh, b_ih, b_hh, w_fc, b_fc)
    out = jax.block_until_ready(out)

    ref = _reference_forward(x, w_ih, w_hh, b_ih, b_hh, w_fc, b_fc)
    assert out.shape == (B, 1), out.shape
    assert jnp.allclose(out, ref, atol=1e-5, rtol=1e-5), (out, ref)

    print("KERNEL_OK")
</pallas_src>

<mosaic_0001>
module attributes {stable_mosaic.version = 11 : i64} {
  func.func @_rnn_fc_kernel(%arg0: memref<16x3xf32, #tpu.memory_space<vmem>>, %arg1: memref<3x64xf32, #tpu.memory_space<vmem>>, %arg2: memref<2x64xf32, #tpu.memory_space<vmem>>, %arg3: memref<64x64xf32, #tpu.memory_space<vmem>>, %arg4: memref<1x1xf32, #tpu.memory_space<smem>>, %arg5: memref<2x1xf32, #tpu.memory_space<vmem>>) attributes {dimension_semantics = [], scalar_prefetch = 0 : i64, scratch_operands = 0 : i64, tpu.core_type = #tpu.core_type<tc>} {
    %c0 = arith.constant 0 : index
    %c0_0 = arith.constant 0 : index
    %0 = vector.load %arg2[%c0, %c0_0] : memref<2x64xf32, #tpu.memory_space<vmem>>, vector<1x64xf32>
    %c1 = arith.constant 1 : index
    %c0_1 = arith.constant 0 : index
    %1 = vector.load %arg2[%c1, %c0_1] : memref<2x64xf32, #tpu.memory_space<vmem>>, vector<1x64xf32>
    %c0_2 = arith.constant 0 : index
    %c0_3 = arith.constant 0 : index
    %2 = vector.load %arg0[%c0_2, %c0_3] : memref<16x3xf32, #tpu.memory_space<vmem>>, vector<16x3xf32>
    %c0_4 = arith.constant 0 : index
    %c0_5 = arith.constant 0 : index
    %3 = vector.load %arg1[%c0_4, %c0_5] : memref<3x64xf32, #tpu.memory_space<vmem>>, vector<3x64xf32>
    %cst = arith.constant dense<0.000000e+00> : vector<16x64xf32>
    %4 = tpu.matmul %2, %3, %cst {dimension_numbers = #tpu.dot_dimension_numbers<[1], [0], [0], [1], [0, 0, 1, 1], [], []>} : vector<16x3xf32>, vector<3x64xf32>, vector<16x64xf32> -> vector<16x64xf32>
    %5 = vector.broadcast %0 : vector<1x64xf32> to vector<16x64xf32>
    %6 = arith.addf %4, %5 : vector<16x64xf32>
    %c0_6 = arith.constant 0 : index
    %c0_7 = arith.constant 0 : index
    %7 = vector.load %arg3[%c0_6, %c0_7] : memref<64x64xf32, #tpu.memory_space<vmem>>, vector<64x64xf32>
    %8 = vector.extract_strided_slice %6 {offsets = [0, 0], sizes = [2, 64], strides = [1, 1]} : vector<16x64xf32> to vector<2x64xf32>
    %9 = math.tanh %8 : vector<2x64xf32>
    %10 = vector.extract_strided_slice %6 {offsets = [2, 0], sizes = [2, 64], strides = [1, 1]} : vector<16x64xf32> to vector<2x64xf32>
    %cst_8 = arith.constant dense<0.000000e+00> : vector<2x64xf32>
    %11 = tpu.matmul %9, %7, %cst_8 {dimension_numbers = #tpu.dot_dimension_numbers<[1], [0], [0], [1], [0, 0, 1, 1], [], []>} : vector<2x64xf32>, vector<64x64xf32>, vector<2x64xf32> -> vector<2x64xf32>
    %12 = arith.addf %10, %11 : vector<2x64xf32>
    %13 = math.tanh %12 : vector<2x64xf32>
    %14 = vector.extract_strided_slice %6 {offsets = [4, 0], sizes = [2, 64], strides = [1, 1]} : vector<16x64xf32> to vector<2x64xf32>
    %cst_9 = arith.constant dense<0.000000e+00> : vector<2x64xf32>
    %15 = tpu.matmul %13, %7, %cst_9 {dimension_numbers = #tpu.dot_dimension_numbers<[1], [0], [0], [1], [0, 0, 1, 1], [], []>} : vector<2x64xf32>, vector<64x64xf32>, vector<2x64xf32> -> vector<2x64xf32>
    %16 = arith.addf %14, %15 : vector<2x64xf32>
    %17 = math.tanh %16 : vector<2x64xf32>
    %18 = vector.extract_strided_slice %6 {offsets = [6, 0], sizes = [2, 64], strides = [1, 1]} : vector<16x64xf32> to vector<2x64xf32>
    %cst_10 = arith.constant dense<0.000000e+00> : vector<2x64xf32>
    %19 = tpu.matmul %17, %7, %cst_10 {dimension_numbers = #tpu.dot_dimension_numbers<[1], [0], [0], [1], [0, 0, 1, 1], [], []>} : vector<2x64xf32>, vector<64x64xf32>, vector<2x64xf32> -> vector<2x64xf32>
    %20 = arith.addf %18, %19 : vector<2x64xf32>
    %21 = math.tanh %20 : vector<2x64xf32>
    %22 = vector.extract_strided_slice %6 {offsets = [8, 0], sizes = [2, 64], strides = [1, 1]} : vector<16x64xf32> to vector<2x64xf32>
    %cst_11 = arith.constant dense<0.000000e+00> : vector<2x64xf32>
    %23 = tpu.matmul %21, %7, %cst_11 {dimension_numbers = #tpu.dot_dimension_numbers<[1], [0], [0], [1], [0, 0, 1, 1], [], []>} : vector<2x64xf32>, vector<64x64xf32>, vector<2x64xf32> -> vector<2x64xf32>
    %24 = arith.addf %22, %23 : vector<2x64xf32>
    %25 = math.tanh %24 : vector<2x64xf32>
    %26 = vector.extract_strided_slice %6 {offsets = [10, 0], sizes = [2, 64], strides = [1, 1]} : vector<16x64xf32> to vector<2x64xf32>
    %cst_12 = arith.constant dense<0.000000e+00> : vector<2x64xf32>
    %27 = tpu.matmul %25, %7, %cst_12 {dimension_numbers = #tpu.dot_dimension_numbers<[1], [0], [0], [1], [0, 0, 1, 1], [], []>} : vector<2x64xf32>, vector<64x64xf32>, vector<2x64xf32> -> vector<2x64xf32>
    %28 = arith.addf %26, %27 : vector<2x64xf32>
    %29 = math.tanh %28 : vector<2x64xf32>
    %30 = vector.extract_strided_slice %6 {offsets = [12, 0], sizes = [2, 64], strides = [1, 1]} : vector<16x64xf32> to vector<2x64xf32>
    %cst_13 = arith.constant dense<0.000000e+00> : vector<2x64xf32>
    %31 = tpu.matmul %29, %7, %cst_13 {dimension_numbers = #tpu.dot_dimension_numbers<[1], [0], [0], [1], [0, 0, 1, 1], [], []>} : vector<2x64xf32>, vector<64x64xf32>, vector<2x64xf32> -> vector<2x64xf32>
    %32 = arith.addf %30, %31 : vector<2x64xf32>
    %33 = math.tanh %32 : vector<2x64xf32>
    %34 = vector.extract_strided_slice %6 {offsets = [14, 0], sizes = [2, 64], strides = [1, 1]} : vector<16x64xf32> to vector<2x64xf32>
    %cst_14 = arith.constant dense<0.000000e+00> : vector<2x64xf32>
    %35 = tpu.matmul %33, %7, %cst_14 {dimension_numbers = #tpu.dot_dimension_numbers<[1], [0], [0], [1], [0, 0, 1, 1], [], []>} : vector<2x64xf32>, vector<64x64xf32>, vector<2x64xf32> -> vector<2x64xf32>
    %36 = arith.addf %34, %35 : vector<2x64xf32>
    %37 = math.tanh %36 : vector<2x64xf32>
    %38 = vector.broadcast %1 : vector<1x64xf32> to vector<2x64xf32>
    %39 = arith.mulf %37, %38 : vector<2x64xf32>
    %cst_15 = arith.constant dense<0.000000e+00> : vector<2xf32>
    %40 = vector.multi_reduction <add>, %39, %cst_15 [1] : vector<2x64xf32> to vector<2xf32>
    %41 = vector.shape_cast %40 : vector<2xf32> to vector<2x1xf32>
    %c0_16 = arith.constant 0 : index
    %c0_17 = arith.constant 0 : index
    %42 = memref.load %arg4[%c0_16, %c0_17] : memref<1x1xf32, #tpu.memory_space<smem>>
    %43 = vector.broadcast %42 : f32 to vector<2x1xf32>
    %44 = arith.addf %41, %43 : vector<2x1xf32>
    %c0_18 = arith.constant 0 : index
    %c0_19 = arith.constant 0 : index
    %45 = vector.load %arg5[%c0_18, %c0_19] : memref<2x1xf32, #tpu.memory_space<vmem>>, vector<2x1xf32>
    tpu.vector_store %arg5[%c0_18, %c0_19], %44 {strides = array<i32>} : memref<2x1xf32, #tpu.memory_space<vmem>>, vector<2x1xf32>,
    return
  }
}

</mosaic_0001>

<llo_original>
// kernel: rnn_model_forward.1
$region0: #{rnn_model_forward.1}
  #allocation0 [shape = 'u32[]', space=smem, size = 0x4, offset = 0x4, fixed_abs, tag = 'smem constant byte address 0x4 - core index']
  #allocation1 [shape = 'u32[144,128]{1,0:T(1,128)}', space=vmem, size = 0x12000, scoped, tag = 'internal scratch']
  #allocation2 [shape = 'f32[1,1]{1,0:T(1,128)S(6)}', space=smem, size = 0x200, scoped, tag = 'scoped memory for rnn_model_forward.1']
  %s0 = inlined_call_operand.vmem [shape: f32[16,3], index: 0, kind: input, shape index: {}]
  %s1 = inlined_call_operand.vmem [shape: f32[3,64], index: 1, kind: input, shape index: {}]
  %s2 = inlined_call_operand.vmem [shape: f32[2,64], index: 2, kind: input, shape index: {}]
  %s3 = inlined_call_operand.vmem [shape: f32[64,64], index: 3, kind: input, shape index: {}]
  %s4 = inlined_call_operand.<no memory space> [shape: f32[1,1], index: 4, kind: input, shape index: {}]
  %s5 = inlined_call_operand.vmem [shape: f32[2,1], index: 5, kind: output, shape index: {}]
  %s6 = sld [smem:[#allocation0]]
  $region30: #{rnn_model_forward.1} parent=0
    _
  %s8 = ssub.s32 1, %s6
  %s9 = scalar_select 0, %s8, %s6
  %10 = sst [smem:[#allocation2]] %s4
  // Predicated region
  $region2: #{rnn_model_forward.1} parent=0 // pred_check
    _
  $region3: #{rnn_model_forward.1} parent=0 // pred_check_branch
    %12 = sbr.rel (0) target = $region5
  $region4: #{rnn_model_forward.1} parent=0 // pred_region
    _
  $region5: #{rnn_model_forward.1} parent=0 // pred_fallthru
    _
  // Predicated region
  $region6: #{rnn_model_forward.1} parent=0 // pred_check
    _
  $region7: #{rnn_model_forward.1} parent=0 // pred_check_branch
    %14 = sbr.rel (0) target = $region9
  $region8: #{rnn_model_forward.1} parent=0 // pred_region
    _
  $region9: #{rnn_model_forward.1} parent=0 // pred_fallthru
    _
  // Predicated region
  $region10: #{rnn_model_forward.1} parent=0 // pred_check
    _
  $region11: #{rnn_model_forward.1} parent=0 // pred_check_branch
    %16 = sbr.rel (0) target = $region13
  $region12: #{rnn_model_forward.1} parent=0 // pred_region
    _
  $region13: #{rnn_model_forward.1} parent=0 // pred_fallthru
    _
  // Predicated region
  $region14: #{rnn_model_forward.1} parent=0 // pred_check
    _
  $region15: #{rnn_model_forward.1} parent=0 // pred_check_branch
    %18 = sbr.rel (0) target = $region17
  $region16: #{rnn_model_forward.1} parent=0 // pred_region
    _
  $region17: #{rnn_model_forward.1} parent=0 // pred_fallthru
    _
  // Predicated region
  $region18: #{rnn_model_forward.1} parent=0 // pred_check
    _
  $region19: #{rnn_model_forward.1} parent=0 // pred_check_branch
    %20 = sbr.rel (0) target = $region21
  $region20: #{rnn_model_forward.1} parent=0 // pred_region
    _
  $region21: #{rnn_model_forward.1} parent=0 // pred_fallthru
    _
  %v21 = vld [vmem:[%s2] sm:$0x1]
  %v22 = vld [vmem:[%s2 + $0x1] sm:$0x1]
  %v23 = vld [vmem:[%s0] sm:$0xff]
  %v24 = vld [vmem:[%s0 + $0x8] sm:$0xff]
  %v25 = vld [vmem:[%s1] sm:$0x7]
  %v26 = vlaneseq
  %v27 = vshrl.u32 %v26, 7
  %v28 = vsub.s32 0, %v27
  %v29 = vrot.slane %v21, %v28
  %vm30 = vcmask 23552
  %v32 = vsel %vm30, %v23, 0
  %v35 = vsel %vm30, %v24, 0
  %vm37 = vcmask 1042432
  %v39 = vsel %vm37, %v25, 0
  %41 = vmatprep.subr.mxu0 0.0
  %42 = vmatpush1.msra.mxu0 %v39
  %43 = vmatprep.subr.mxu0 0.0
  %44 = vmatpush1.msra.mxu0 0.0
  %45 = vmatprep.subr.mxu0 0.0
  %46 = vmatpush1.msra.mxu0 0.0
  %47 = vmatprep.subr.mxu0 0.0
  %48 = vmatpush1.msra.mxu0 0.0
  %49 = vmatprep.subr.mxu0 0.0
  %50 = vmatpush1.msra.mxu0 0.0
  %51 = vmatprep.subr.mxu0 0.0
  %52 = vmatpush1.msra.mxu0 0.0
  %53 = vmatprep.subr.mxu0 0.0
  %54 = vmatpush1.msra.mxu0 0.0
  %55 = vmatprep.subr.mxu0 0.0
  %56 = vmatpush1.msra.mxu0 0.0
  %57 = vmatprep.subr.mxu0 0.0
  %58 = vmatpush1.msra.mxu0 0.0
  %59 = vmatprep.subr.mxu0 0.0
  %60 = vmatpush1.msra.mxu0 0.0
  %61 = vmatprep.subr.mxu0 0.0
  %62 = vmatpush1.msra.mxu0 0.0
  %63 = vmatprep.subr.mxu0 0.0
  %64 = vmatpush1.msra.mxu0 0.0
  %65 = vmatprep.subr.mxu0 0.0
  %66 = vmatpush1.msra.mxu0 0.0
  %67 = vmatprep.subr.mxu0 0.0
  %68 = vmatpush1.msra.mxu0 0.0
  %69 = vmatprep.subr.mxu0 0.0
  %70 = vmatpush1.msra.mxu0 0.0
  %71 = vmatprep.subr.mxu0 0.0
  %72 = vmatpush1.msra.mxu0 0.0
  %73 = vmatprep.subr.mxu0 0.0
  %74 = vmatpush1.msra.mxu0 0.0
  %75 = vmatprep.subr.mxu0 0.0
  %76 = vmatpush1.msra.mxu0 0.0
  %77 = vmatprep.subr.mxu0 0.0
  %78 = vmatpush1.msra.mxu0 0.0
  %79 = vmatprep.subr.mxu0 0.0
  %80 = vmatpush1.msra.mxu0 0.0
  %81 = vmatprep.subr.mxu0 0.0
  %82 = vmatpush1.msra.mxu0 0.0
  %83 = vmatprep.subr.mxu0 0.0
  %84 = vmatpush1.msra.mxu0 0.0
  %85 = vmatprep.subr.mxu0 0.0
  %86 = vmatpush1.msra.mxu0 0.0
  %87 = vmatprep.subr.mxu0 0.0
  %88 = vmatpush1.msra.mxu0 0.0
  %89 = vmatprep.subr.mxu0 0.0
  %90 = vmatpush1.msra.mxu0 0.0
  %91 = vmatprep.subr.mxu0 0.0
  %92 = vmatpush1.msra.mxu0 0.0
  %93 = vmatprep.subr.mxu0 0.0
  %94 = vmatpush1.msra.mxu0 0.0
  %95 = vmatprep.subr.mxu0 0.0
  %96 = vmatpush1.msra.mxu0 0.0
  %97 = vmatprep.subr.mxu0 0.0
  %98 = vmatpush1.msra.mxu0 0.0
  %99 = vmatprep.subr.mxu0 0.0
  %100 = vmatpush1.msra.mxu0 0.0
  %101 = vmatprep.subr.mxu0 0.0
  %102 = vmatpush1.msra.mxu0 0.0
  %103 = vmatprep.subr.mxu0 0.0
  %104 = vmatpush1.msra.mxu0 0.0
  %105 = vmatprep.mubr.f32.mxu0 0.0
  %106 = vmatmul.mubr.f32.gmra.mrb[0].mxu0 %v32
  %v107 = vpop.f32.mrb[0].mxu0
  %v108 = vadd.f32 %v29, %v107
  %v109 = vpop.f32.mrb[0].mxu0
  %110 = vmatprep.mubr.f32.mxu0 0.0
  %111 = vmatmul.mubr.f32.gmra.mrb[0].mxu0 %v35
  %v112 = vpop.f32.mrb[0].mxu0
  %v113 = vadd.f32 %v29, %v112
  %v114 = vpop.f32.mrb[0].mxu0
  %115 = vdwg.mxu0
  %v116 = vld [vmem:[%s3] sm:$0xff]
  %v117 = vld [vmem:[%s3 + $0x8] sm:$0xff]
  %v118 = vld [vmem:[%s3 + $0x10] sm:$0xff]
  %v119 = vld [vmem:[%s3 + $0x18] sm:$0xff]
  %v120 = vld [vmem:[%s3 + $0x20] sm:$0xff]
  %v121 = vld [vmem:[%s3 + $0x28] sm:$0xff]
  %v122 = vld [vmem:[%s3 + $0x30] sm:$0xff]
  %v123 = vld [vmem:[%s3 + $0x38] sm:$0xff]
  %v124 = vtanh.pop %v108
  %vm125 = vcmask 523264
  %v127 = vsel %vm125, %v124, 0
  %129 = vmatprep.subr.mxu0 0.0
  %130 = vmatpush1.msra.mxu0 %v116
  %131 = vmatprep.subr.mxu0 0.0
  %132 = vmatpush1.msra.mxu0 %v117
  %133 = vmatprep.subr.mxu0 0.0
  %134 = vmatpush1.msra.mxu0 %v118
  %135 = vmatprep.subr.mxu0 0.0
  %136 = vmatpush1.msra.mxu0 %v119
  %137 = vmatprep.subr.mxu0 0.0
  %138 = vmatpush1.msra.mxu0 %v120
  %139 = vmatprep.subr.mxu0 0.0
  %140 = vmatpush1.msra.mxu0 %v121
  %141 = vmatprep.subr.mxu0 0.0
  %142 = vmatpush1.msra.mxu0 %v122
  %143 = vmatprep.subr.mxu0 0.0
  %144 = vmatpush1.msra.mxu0 %v123
  %145 = vmatprep.subr.mxu0 0.0
  %146 = vmatpush1.msra.mxu0 0.0
  %147 = vmatprep.subr.mxu0 0.0
  %148 = vmatpush1.msra.mxu0 0.0
  %149 = vmatprep.subr.mxu0 0.0
  %150 = vmatpush1.msra.mxu0 0.0
  %151 = vmatprep.subr.mxu0 0.0
  %152 = vmatpush1.msra.mxu0 0.0
  %153 = vmatprep.subr.mxu0 0.0
  %154 = vmatpush1.msra.mxu0 0.0
  %155 = vmatprep.subr.mxu0 0.0
  %156 = vmatpush1.msra.mxu0 0.0
  %157 = vmatprep.subr.mxu0 0.0
  %158 = vmatpush1.msra.mxu0 0.0
  %159 = vmatprep.subr.mxu0 0.0
  %160 = vmatpush1.msra.mxu0 0.0
  %161 = vmatprep.subr.mxu0 0.0
  %162 = vmatpush1.msra.mxu0 0.0
  %163 = vmatprep.subr.mxu0 0.0
  %164 = vmatpush1.msra.mxu0 0.0
  %165 = vmatprep.subr.mxu0 0.0
  %166 = vmatpush1.msra.mxu0 0.0
  %167 = vmatprep.subr.mxu0 0.0
  %168 = vmatpush1.msra.mxu0 0.0
  %169 = vmatprep.subr.mxu0 0.0
  %170 = vmatpush1.msra.mxu0 0.0
  %171 = vmatprep.subr.mxu0 0.0
  %172 = vmatpush1.msra.mxu0 0.0
  %173 = vmatprep.subr.mxu0 0.0
  %174 = vmatpush1.msra.mxu0 0.0
  %175 = vmatprep.subr.mxu0 0.0
  %176 = vmatpush1.msra.mxu0 0.0
  %177 = vmatprep.subr.mxu0 0.0
  %178 = vmatpush1.msra.mxu0 0.0
  %179 = vmatprep.subr.mxu0 0.0
  %180 = vmatpush1.msra.mxu0 0.0
  %181 = vmatprep.subr.mxu0 0.0
  %182 = vmatpush1.msra.mxu0 0.0
  %183 = vmatprep.subr.mxu0 0.0
  %184 = vmatpush1.msra.mxu0 0.0
  %185 = vmatprep.subr.mxu0 0.0
  %186 = vmatpush1.msra.mxu0 0.0
  %187 = vmatprep.subr.mxu0 0.0
  %188 = vmatpush1.msra.mxu0 0.0
  %189 = vmatprep.subr.mxu0 0.0
  %190 = vmatpush1.msra.mxu0 0.0
  %191 = vmatprep.subr.mxu0 0.0
  %192 = vmatpush1.msra.mxu0 0.0
  %193 = vmatprep.mubr.f32.mxu0 0.0
  %194 = vmatmul.mubr.f32.gmra.mrb[0].mxu0 %v127
  %v195 = vpop.f32.mrb[0].mxu0
  %v196 = vadd.f32 0.0, %v195
  %v197 = vpop.f32.mrb[0].mxu0
  %198 = vdwg.mxu0
  %v200 = vrot.slane %v196, 6
  %v202 = vadd.f32 %v108, %v200
  %v203 = vtanh.pop %v202
  %v205 = vrot.slane %v203, 2
  %v206 = vsel %vm125, %v205, 0
  %208 = vmatprep.subr.mxu0 0.0
  %209 = vmatpush1.msra.mxu0 %v116
  %210 = vmatprep.subr.mxu0 0.0
  %211 = vmatpush1.msra.mxu0 %v117
  %212 = vmatprep.subr.mxu0 0.0
  %213 = vmatpush1.msra.mxu0 %v118
  %214 = vmatprep.subr.mxu0 0.0
  %215 = vmatpush1.msra.mxu0 %v119
  %216 = vmatprep.subr.mxu0 0.0
  %217 = vmatpush1.msra.mxu0 %v120
  %218 = vmatprep.subr.mxu0 0.0
  %219 = vmatpush1.msra.mxu0 %v121
  %220 = vmatprep.subr.mxu0 0.0
  %221 = vmatpush1.msra.mxu0 %v122
  %222 = vmatprep.subr.mxu0 0.0
  %223 = vmatpush1.msra.mxu0 %v123
  %224 = vmatprep.subr.mxu0 0.0
  %225 = vmatpush1.msra.mxu0 0.0
  %226 = vmatprep.subr.mxu0 0.0
  %227 = vmatpush1.msra.mxu0 0.0
  %228 = vmatprep.subr.mxu0 0.0
  %229 = vmatpush1.msra.mxu0 0.0
  %230 = vmatprep.subr.mxu0 0.0
  %231 = vmatpush1.msra.mxu0 0.0
  %232 = vmatprep.subr.mxu0 0.0
  %233 = vmatpush1.msra.mxu0 0.0
  %234 = vmatprep.subr.mxu0 0.0
  %235 = vmatpush1.msra.mxu0 0.0
  %236 = vmatprep.subr.mxu0 0.0
  %237 = vmatpush1.msra.mxu0 0.0
  %238 = vmatprep.subr.mxu0 0.0
  %239 = vmatpush1.msra.mxu0 0.0
  %240 = vmatprep.subr.mxu0 0.0
  %241 = vmatpush1.msra.mxu0 0.0
  %242 = vmatprep.subr.mxu0 0.0
  %243 = vmatpush1.msra.mxu0 0.0
  %244 = vmatprep.subr.mxu0 0.0
  %245 = vmatpush1.msra.mxu0 0.0
  %246 = vmatprep.subr.mxu0 0.0
  %247 = vmatpush1.msra.mxu0 0.0
  %248 = vmatprep.subr.mxu0 0.0
  %249 = vmatpush1.msra.mxu0 0.0
  %250 = vmatprep.subr.mxu0 0.0
  %251 = vmatpush1.msra.mxu0 0.0
  %252 = vmatprep.subr.mxu0 0.0
  %253 = vmatpush1.msra.mxu0 0.0
  %254 = vmatprep.subr.mxu0 0.0
  %255 = vmatpush1.msra.mxu0 0.0
  %256 = vmatprep.subr.mxu0 0.0
  %257 = vmatpush1.msra.mxu0 0.0
  %258 = vmatprep.subr.mxu0 0.0
  %259 = vmatpush1.msra.mxu0 0.0
  %260 = vmatprep.subr.mxu0 0.0
  %261 = vmatpush1.msra.mxu0 0.0
  %262 = vmatprep.subr.mxu0 0.0
  %263 = vmatpush1.msra.mxu0 0.0
  %264 = vmatprep.subr.mxu0 0.0
  %265 = vmatpush1.msra.mxu0 0.0
  %266 = vmatprep.subr.mxu0 0.0
  %267 = vmatpush1.msra.mxu0 0.0
  %268 = vmatprep.subr.mxu0 0.0
  %269 = vmatpush1.msra.mxu0 0.0
  %270 = vmatprep.subr.mxu0 0.0
  %271 = vmatpush1.msra.mxu0 0.0
  %272 = vmatprep.mubr.f32.mxu0 0.0
  %273 = vmatmul.mubr.f32.gmra.mrb[0].mxu0 %v206
  %v274 = vpop.f32.mrb[0].mxu0
  %v275 = vadd.f32 0.0, %v274
  %v276 = vpop.f32.mrb[0].mxu0
  %277 = vdwg.mxu0
  %v279 = vrot.slane %v275, 4
  %v281 = vadd.f32 %v108, %v279
  %v282 = vtanh.pop %v281
  %v284 = vrot.slane %v282, 4
  %v285 = vsel %vm125, %v284, 0
  %287 = vmatprep.subr.mxu0 0.0
  %288 = vmatpush1.msra.mxu0 %v116
  %289 = vmatprep.subr.mxu0 0.0
  %290 = vmatpush1.msra.mxu0 %v117
  %291 = vmatprep.subr.mxu0 0.0
  %292 = vmatpush1.msra.mxu0 %v118
  %293 = vmatprep.subr.mxu0 0.0
  %294 = vmatpush1.msra.mxu0 %v119
  %295 = vmatprep.subr.mxu0 0.0
  %296 = vmatpush1.msra.mxu0 %v120
  %297 = vmatprep.subr.mxu0 0.0
  %298 = vmatpush1.msra.mxu0 %v121
  %299 = vmatprep.subr.mxu0 0.0
  %300 = vmatpush1.msra.mxu0 %v122
  %301 = vmatprep.subr.mxu0 0.0
  %302 = vmatpush1.msra.mxu0 %v123
  %303 = vmatprep.subr.mxu0 0.0
  %304 = vmatpush1.msra.mxu0 0.0
  %305 = vmatprep.subr.mxu0 0.0
  %306 = vmatpush1.msra.mxu0 0.0
  %307 = vmatprep.subr.mxu0 0.0
  %308 = vmatpush1.msra.mxu0 0.0
  %309 = vmatprep.subr.mxu0 0.0
  %310 = vmatpush1.msra.mxu0 0.0
  %311 = vmatprep.subr.mxu0 0.0
  %312 = vmatpush1.msra.mxu0 0.0
  %313 = vmatprep.subr.mxu0 0.0
  %314 = vmatpush1.msra.mxu0 0.0
  %315 = vmatprep.subr.mxu0 0.0
  %316 = vmatpush1.msra.mxu0 0.0
  %317 = vmatprep.subr.mxu0 0.0
  %318 = vmatpush1.msra.mxu0 0.0
  %319 = vmatprep.subr.mxu0 0.0
  %320 = vmatpush1.msra.mxu0 0.0
  %321 = vmatprep.subr.mxu0 0.0
  %322 = vmatpush1.msra.mxu0 0.0
  %323 = vmatprep.subr.mxu0 0.0
  %324 = vmatpush1.msra.mxu0 0.0
  %325 = vmatprep.subr.mxu0 0.0
  %326 = vmatpush1.msra.mxu0 0.0
  %327 = vmatprep.subr.mxu0 0.0
  %328 = vmatpush1.msra.mxu0 0.0
  %329 = vmatprep.subr.mxu0 0.0
  %330 = vmatpush1.msra.mxu0 0.0
  %331 = vmatprep.subr.mxu0 0.0
  %332 = vmatpush1.msra.mxu0 0.0
  %333 = vmatprep.subr.mxu0 0.0
  %334 = vmatpush1.msra.mxu0 0.0
  %335 = vmatprep.subr.mxu0 0.0
  %336 = vmatpush1.msra.mxu0 0.0
  %337 = vmatprep.subr.mxu0 0.0
  %338 = vmatpush1.msra.mxu0 0.0
  %339 = vmatprep.subr.mxu0 0.0
  %340 = vmatpush1.msra.mxu0 0.0
  %341 = vmatprep.subr.mxu0 0.0
  %342 = vmatpush1.msra.mxu0 0.0
  %343 = vmatprep.subr.mxu0 0.0
  %344 = vmatpush1.msra.mxu0 0.0
  %345 = vmatprep.subr.mxu0 0.0
  %346 = vmatpush1.msra.mxu0 0.0
  %347 = vmatprep.subr.mxu0 0.0
  %348 = vmatpush1.msra.mxu0 0.0
  %349 = vmatprep.subr.mxu0 0.0
  %350 = vmatpush1.msra.mxu0 0.0
  %351 = vmatprep.mubr.f32.mxu0 0.0
  %352 = vmatmul.mubr.f32.gmra.mrb[0].mxu0 %v285
  %v353 = vpop.f32.mrb[0].mxu0
  %v354 = vadd.f32 0.0, %v353
  %v355 = vpop.f32.mrb[0].mxu0
  %356 = vdwg.mxu0
  %v358 = vrot.slane %v354, 2
  %v360 = vadd.f32 %v108, %v358
  %v361 = vtanh.pop %v360
  %v363 = vrot.slane %v361, 6
  %v364 = vsel %vm125, %v363, 0
  %366 = vmatprep.subr.mxu0 0.0
  %367 = vmatpush1.msra.mxu0 %v116
  %368 = vmatprep.subr.mxu0 0.0
  %369 = vmatpush1.msra.mxu0 %v117
  %370 = vmatprep.subr.mxu0 0.0
  %371 = vmatpush1.msra.mxu0 %v118
  %372 = vmatprep.subr.mxu0 0.0
  %373 = vmatpush1.msra.mxu0 %v119
  %374 = vmatprep.subr.mxu0 0.0
  %375 = vmatpush1.msra.mxu0 %v120
  %376 = vmatprep.subr.mxu0 0.0
  %377 = vmatpush1.msra.mxu0 %v121
  %378 = vmatprep.subr.mxu0 0.0
  %379 = vmatpush1.msra.mxu0 %v122
  %380 = vmatprep.subr.mxu0 0.0
  %381 = vmatpush1.msra.mxu0 %v123
  %382 = vmatprep.subr.mxu0 0.0
  %383 = vmatpush1.msra.mxu0 0.0
  %384 = vmatprep.subr.mxu0 0.0
  %385 = vmatpush1.msra.mxu0 0.0
  %386 = vmatprep.subr.mxu0 0.0
  %387 = vmatpush1.msra.mxu0 0.0
  %388 = vmatprep.subr.mxu0 0.0
  %389 = vmatpush1.msra.mxu0 0.0
  %390 = vmatprep.subr.mxu0 0.0
  %391 = vmatpush1.msra.mxu0 0.0
  %392 = vmatprep.subr.mxu0 0.0
  %393 = vmatpush1.msra.mxu0 0.0
  %394 = vmatprep.subr.mxu0 0.0
  %395 = vmatpush1.msra.mxu0 0.0
  %396 = vmatprep.subr.mxu0 0.0
  %397 = vmatpush1.msra.mxu0 0.0
  %398 = vmatprep.subr.mxu0 0.0
  %399 = vmatpush1.msra.mxu0 0.0
  %400 = vmatprep.subr.mxu0 0.0
  %401 = vmatpush1.msra.mxu0 0.0
  %402 = vmatprep.subr.mxu0 0.0
  %403 = vmatpush1.msra.mxu0 0.0
  %404 = vmatprep.subr.mxu0 0.0
  %405 = vmatpush1.msra.mxu0 0.0
  %406 = vmatprep.subr.mxu0 0.0
  %407 = vmatpush1.msra.mxu0 0.0
  %408 = vmatprep.subr.mxu0 0.0
  %409 = vmatpush1.msra.mxu0 0.0
  %410 = vmatprep.subr.mxu0 0.0
  %411 = vmatpush1.msra.mxu0 0.0
  %412 = vmatprep.subr.mxu0 0.0
  %413 = vmatpush1.msra.mxu0 0.0
  %414 = vmatprep.subr.mxu0 0.0
  %415 = vmatpush1.msra.mxu0 0.0
  %416 = vmatprep.subr.mxu0 0.0
  %417 = vmatpush1.msra.mxu0 0.0
  %418 = vmatprep.subr.mxu0 0.0
  %419 = vmatpush1.msra.mxu0 0.0
  %420 = vmatprep.subr.mxu0 0.0
  %421 = vmatpush1.msra.mxu0 0.0
  %422 = vmatprep.subr.mxu0 0.0
  %423 = vmatpush1.msra.mxu0 0.0
  %424 = vmatprep.subr.mxu0 0.0
  %425 = vmatpush1.msra.mxu0 0.0
  %426 = vmatprep.subr.mxu0 0.0
  %427 = vmatpush1.msra.mxu0 0.0
  %428 = vmatprep.subr.mxu0 0.0
  %429 = vmatpush1.msra.mxu0 0.0
  %430 = vmatprep.mubr.f32.mxu0 0.0
  %431 = vmatmul.mubr.f32.gmra.mrb[0].mxu0 %v364
  %v432 = vpop.f32.mrb[0].mxu0
  %v433 = vadd.f32 0.0, %v432
  %v434 = vpop.f32.mrb[0].mxu0
  %435 = vdwg.mxu0
  %v436 = vadd.f32 %v113, %v433
  %v437 = vtanh.pop %v436
  %v439 = vsel %vm125, %v437, 0
  %441 = vmatprep.subr.mxu0 0.0
  %442 = vmatpush1.msra.mxu0 %v116
  %443 = vmatprep.subr.mxu0 0.0
  %444 = vmatpush1.msra.mxu0 %v117
  %445 = vmatprep.subr.mxu0 0.0
  %446 = vmatpush1.msra.mxu0 %v118
  %447 = vmatprep.subr.mxu0 0.0
  %448 = vmatpush1.msra.mxu0 %v119
  %449 = vmatprep.subr.mxu0 0.0
  %450 = vmatpush1.msra.mxu0 %v120
  %451 = vmatprep.subr.mxu0 0.0
  %452 = vmatpush1.msra.mxu0 %v121
  %453 = vmatprep.subr.mxu0 0.0
  %454 = vmatpush1.msra.mxu0 %v122
  %455 = vmatprep.subr.mxu0 0.0
  %456 = vmatpush1.msra.mxu0 %v123
  %457 = vmatprep.subr.mxu0 0.0
  %458 = vmatpush1.msra.mxu0 0.0
  %459 = vmatprep.subr.mxu0 0.0
  %460 = vmatpush1.msra.mxu0 0.0
  %461 = vmatprep.subr.mxu0 0.0
  %462 = vmatpush1.msra.mxu0 0.0
  %463 = vmatprep.subr.mxu0 0.0
  %464 = vmatpush1.msra.mxu0 0.0
  %465 = vmatprep.subr.mxu0 0.0
  %466 = vmatpush1.msra.mxu0 0.0
  %467 = vmatprep.subr.mxu0 0.0
  %468 = vmatpush1.msra.mxu0 0.0
  %469 = vmatprep.subr.mxu0 0.0
  %470 = vmatpush1.msra.mxu0 0.0
  %471 = vmatprep.subr.mxu0 0.0
  %472 = vmatpush1.msra.mxu0 0.0
  %473 = vmatprep.subr.mxu0 0.0
  %474 = vmatpush1.msra.mxu0 0.0
  %475 = vmatprep.subr.mxu0 0.0
  %476 = vmatpush1.msra.mxu0 0.0
  %477 = vmatprep.subr.mxu0 0.0
  %478 = vmatpush1.msra.mxu0 0.0
  %479 = vmatprep.subr.mxu0 0.0
  %480 = vmatpush1.msra.mxu0 0.0
  %481 = vmatprep.subr.mxu0 0.0
  %482 = vmatpush1.msra.mxu0 0.0
  %483 = vmatprep.subr.mxu0 0.0
  %484 = vmatpush1.msra.mxu0 0.0
  %485 = vmatprep.subr.mxu0 0.0
  %486 = vmatpush1.msra.mxu0 0.0
  %487 = vmatprep.subr.mxu0 0.0
  %488 = vmatpush1.msra.mxu0 0.0
  %489 = vmatprep.subr.mxu0 0.0
  %490 = vmatpush1.msra.mxu0 0.0
  %491 = vmatprep.subr.mxu0 0.0
  %492 = vmatpush1.msra.mxu0 0.0
  %493 = vmatprep.subr.mxu0 0.0
  %494 = vmatpush1.msra.mxu0 0.0
  %495 = vmatprep.subr.mxu0 0.0
  %496 = vmatpush1.msra.mxu0 0.0
  %497 = vmatprep.subr.mxu0 0.0
  %498 = vmatpush1.msra.mxu0 0.0
  %499 = vmatprep.subr.mxu0 0.0
  %500 = vmatpush1.msra.mxu0 0.0
  %501 = vmatprep.subr.mxu0 0.0
  %502 = vmatpush1.msra.mxu0 0.0
  %503 = vmatprep.subr.mxu0 0.0
  %504 = vmatpush1.msra.mxu0 0.0
  %505 = vmatprep.mubr.f32.mxu0 0.0
  %506 = vmatmul.mubr.f32.gmra.mrb[0].mxu0 %v439
  %v507 = vpop.f32.mrb[0].mxu0
  %v508 = vadd.f32 0.0, %v507
  %v509 = vpop.f32.mrb[0].mxu0
  %510 = vdwg.mxu0
  %v512 = vrot.slane %v508, 6
  %v514 = vadd.f32 %v113, %v512
  %v515 = vtanh.pop %v514
  %v517 = vrot.slane %v515, 2
  %v518 = vsel %vm125, %v517, 0
  %520 = vmatprep.subr.mxu0 0.0
  %521 = vmatpush1.msra.mxu0 %v116
  %522 = vmatprep.subr.mxu0 0.0
  %523 = vmatpush1.msra.mxu0 %v117
  %524 = vmatprep.subr.mxu0 0.0
  %525 = vmatpush1.msra.mxu0 %v118
  %526 = vmatprep.subr.mxu0 0.0
  %527 = vmatpush1.msra.mxu0 %v119
  %528 = vmatprep.subr.mxu0 0.0
  %529 = vmatpush1.msra.mxu0 %v120
  %530 = vmatprep.subr.mxu0 0.0
  %531 = vmatpush1.msra.mxu0 %v121
  %532 = vmatprep.subr.mxu0 0.0
  %533 = vmatpush1.msra.mxu0 %v122
  %534 = vmatprep.subr.mxu0 0.0
  %535 = vmatpush1.msra.mxu0 %v123
  %536 = vmatprep.subr.mxu0 0.0
  %537 = vmatpush1.msra.mxu0 0.0
  %538 = vmatprep.subr.mxu0 0.0
  %539 = vmatpush1.msra.mxu0 0.0
  %540 = vmatprep.subr.mxu0 0.0
  %541 = vmatpush1.msra.mxu0 0.0
  %542 = vmatprep.subr.mxu0 0.0
  %543 = vmatpush1.msra.mxu0 0.0
  %544 = vmatprep.subr.mxu0 0.0
  %545 = vmatpush1.msra.mxu0 0.0
  %546 = vmatprep.subr.mxu0 0.0
  %547 = vmatpush1.msra.mxu0 0.0
  %548 = vmatprep.subr.mxu0 0.0
  %549 = vmatpush1.msra.mxu0 0.0
  %550 = vmatprep.subr.mxu0 0.0
  %551 = vmatpush1.msra.mxu0 0.0
  %552 = vmatprep.subr.mxu0 0.0
  %553 = vmatpush1.msra.mxu0 0.0
  %554 = vmatprep.subr.mxu0 0.0
  %555 = vmatpush1.msra.mxu0 0.0
  %556 = vmatprep.subr.mxu0 0.0
  %557 = vmatpush1.msra.mxu0 0.0
  %558 = vmatprep.subr.mxu0 0.0
  %559 = vmatpush1.msra.mxu0 0.0
  %560 = vmatprep.subr.mxu0 0.0
  %561 = vmatpush1.msra.mxu0 0.0
  %562 = vmatprep.subr.mxu0 0.0
  %563 = vmatpush1.msra.mxu0 0.0
  %564 = vmatprep.subr.mxu0 0.0
  %565 = vmatpush1.msra.mxu0 0.0
  %566 = vmatprep.subr.mxu0 0.0
  %567 = vmatpush1.msra.mxu0 0.0
  %568 = vmatprep.subr.mxu0 0.0
  %569 = vmatpush1.msra.mxu0 0.0
  %570 = vmatprep.subr.mxu0 0.0
  %571 = vmatpush1.msra.mxu0 0.0
  %572 = vmatprep.subr.mxu0 0.0
  %573 = vmatpush1.msra.mxu0 0.0
  %574 = vmatprep.subr.mxu0 0.0
  %575 = vmatpush1.msra.mxu0 0.0
  %576 = vmatprep.subr.mxu0 0.0
  %577 = vmatpush1.msra.mxu0 0.0
  %578 = vmatprep.subr.mxu0 0.0
  %579 = vmatpush1.msra.mxu0 0.0
  %580 = vmatprep.subr.mxu0 0.0
  %581 = vmatpush1.msra.mxu0 0.0
  %582 = vmatprep.subr.mxu0 0.0
  %583 = vmatpush1.msra.mxu0 0.0
  %584 = vmatprep.mubr.f32.mxu0 0.0
  %585 = vmatmul.mubr.f32.gmra.mrb[0].mxu0 %v518
  %v586 = vpop.f32.mrb[0].mxu0
  %v587 = vadd.f32 0.0, %v586
  %v588 = vpop.f32.mrb[0].mxu0
  %589 = vdwg.mxu0
  %v591 = vrot.slane %v587, 4
  %v593 = vadd.f32 %v113, %v591
  %v594 = vtanh.pop %v593
  %v596 = vrot.slane %v594, 4
  %v597 = vsel %vm125, %v596, 0
  %599 = vmatprep.subr.mxu0 0.0
  %600 = vmatpush1.msra.mxu0 %v116
  %601 = vmatprep.subr.mxu0 0.0
  %602 = vmatpush1.msra.mxu0 %v117
  %603 = vmatprep.subr.mxu0 0.0
  %604 = vmatpush1.msra.mxu0 %v118
  %605 = vmatprep.subr.mxu0 0.0
  %606 = vmatpush1.msra.mxu0 %v119
  %607 = vmatprep.subr.mxu0 0.0
  %608 = vmatpush1.msra.mxu0 %v120
  %609 = vmatprep.subr.mxu0 0.0
  %610 = vmatpush1.msra.mxu0 %v121
  %611 = vmatprep.subr.mxu0 0.0
  %612 = vmatpush1.msra.mxu0 %v122
  %613 = vmatprep.subr.mxu0 0.0
  %614 = vmatpush1.msra.mxu0 %v123
  %615 = vmatprep.subr.mxu0 0.0
  %616 = vmatpush1.msra.mxu0 0.0
  %617 = vmatprep.subr.mxu0 0.0
  %618 = vmatpush1.msra.mxu0 0.0
  %619 = vmatprep.subr.mxu0 0.0
  %620 = vmatpush1.msra.mxu0 0.0
  %621 = vmatprep.subr.mxu0 0.0
  %622 = vmatpush1.msra.mxu0 0.0
  %623 = vmatprep.subr.mxu0 0.0
  %624 = vmatpush1.msra.mxu0 0.0
  %625 = vmatprep.subr.mxu0 0.0
  %626 = vmatpush1.msra.mxu0 0.0
  %627 = vmatprep.subr.mxu0 0.0
  %628 = vmatpush1.msra.mxu0 0.0
  %629 = vmatprep.subr.mxu0 0.0
  %630 = vmatpush1.msra.mxu0 0.0
  %631 = vmatprep.subr.mxu0 0.0
  %632 = vmatpush1.msra.mxu0 0.0
  %633 = vmatprep.subr.mxu0 0.0
  %634 = vmatpush1.msra.mxu0 0.0
  %635 = vmatprep.subr.mxu0 0.0
  %636 = vmatpush1.msra.mxu0 0.0
  %637 = vmatprep.subr.mxu0 0.0
  %638 = vmatpush1.msra.mxu0 0.0
  %639 = vmatprep.subr.mxu0 0.0
  %640 = vmatpush1.msra.mxu0 0.0
  %641 = vmatprep.subr.mxu0 0.0
  %642 = vmatpush1.msra.mxu0 0.0
  %643 = vmatprep.subr.mxu0 0.0
  %644 = vmatpush1.msra.mxu0 0.0
  %645 = vmatprep.subr.mxu0 0.0
  %646 = vmatpush1.msra.mxu0 0.0
  %647 = vmatprep.subr.mxu0 0.0
  %648 = vmatpush1.msra.mxu0 0.0
  %649 = vmatprep.subr.mxu0 0.0
  %650 = vmatpush1.msra.mxu0 0.0
  %651 = vmatprep.subr.mxu0 0.0
  %652 = vmatpush1.msra.mxu0 0.0
  %653 = vmatprep.subr.mxu0 0.0
  %654 = vmatpush1.msra.mxu0 0.0
  %655 = vmatprep.subr.mxu0 0.0
  %656 = vmatpush1.msra.mxu0 0.0
  %657 = vmatprep.subr.mxu0 0.0
  %658 = vmatpush1.msra.mxu0 0.0
  %659 = vmatprep.subr.mxu0 0.0
  %660 = vmatpush1.msra.mxu0 0.0
  %661 = vmatprep.subr.mxu0 0.0
  %662 = vmatpush1.msra.mxu0 0.0
  %663 = vmatprep.mubr.f32.mxu0 0.0
  %664 = vmatmul.mubr.f32.gmra.mrb[0].mxu0 %v597
  %v665 = vpop.f32.mrb[0].mxu0
  %v666 = vadd.f32 0.0, %v665
  %v667 = vpop.f32.mrb[0].mxu0
  %668 = vdwg.mxu0
  %v670 = vrot.slane %v666, 2
  %v672 = vadd.f32 %v113, %v670
  %v673 = vtanh.pop %v672
  %v674 = vlaneseq
  %v675 = vshrl.u32 %v674, 7
  %v676 = vsub.s32 0, %v675
  %v677 = vrot.slane %v22, %v676
  %v678 = vmul.f32 %v673, %v677
  %vm679 = vcmask 523270
  %v680 = vsel %vm679, %v678, 0.0
  %681 = vadd.xlane.f32.xlu0 %v680
  %v682 = vpop.xlane.xlu0 %681
  %s683 = sld [smem:[#allocation2]]
  %v684 = vstv %s683
  %v685 = vadd.f32 %v682, %v684
  %vm686 = vcmask 7174
  %687 = vst.msk [vmem:[%s5 - $0x6] sm:$0xc0] %vm686, %v685
  // Predicated region
  $region22: #{rnn_model_forward.1} parent=0 // pred_check
    _
  $region23: #{rnn_model_forward.1} parent=0 // pred_check_branch
    %689 = sbr.rel (0) target = $region25
  $region24: #{rnn_model_forward.1} parent=0 // pred_region
    _
  $region25: #{rnn_model_forward.1} parent=0 // pred_fallthru
    _
  // Predicated region
  $region26: #{rnn_model_forward.1} parent=0 // pred_check
    _
  $region27: #{rnn_model_forward.1} parent=0 // pred_check_branch
    %691 = sbr.rel (0) target = $region29
  $region28: #{rnn_model_forward.1} parent=0 // pred_region
    _
  $region29: #{rnn_model_forward.1} parent=0 // pred_fallthru
    _

</llo_original>
